<compile_context>
chip_gen: v5e
topology: v5e:2x2
jax: 0.10.0
libtpu: 0.0.40
codegen_flags: <defaults>
</compile_context>

<pallas_src>
import numpy as np
import jax
import jax.numpy as jnp
from jax import lax
from jax.experimental import pallas as pl
from jax.experimental.pallas import tpu as pltpu

# ---- module configuration (QuantumHead(input_size=8, n_qubits=4)) ----------
N_QUBITS = 4
DRC_LAYERS = 2                        # = input_size / n_qubits
INPUT_SIZE = N_QUBITS * DRC_LAYERS    # 8
DIM = 1 << N_QUBITS                   # statevector dimension = 16
GROUPS = 128 // DIM                   # batch elements packed per lane-row = 8
HALF_LANES = GROUPS * DIM             # 128 (one of the re / im halves)
LANES = 2 * HALF_LANES                # [re | im] halves -> 256 lanes
BATCH = 16
MAX_TILE_ROWS = 512                   # up to 4096 batch elements per grid step


def _cdiv(a, b):
    return (a + b - 1) // b


def _round_up(a, m):
    return _cdiv(a, m) * m


# ----------------------------- kernel ---------------------------------------
def _quantum_head_kernel(cos_ref, sin_ref, w_ref, out_ref):
    TR, LN = out_ref.shape
    HALF = LN // 2

    # Row-independent lane bookkeeping at (1, LN); broadcasts against (TR, LN).
    pos = lax.broadcasted_iota(jnp.int32, (1, LN), 1)
    posf = pos.astype(jnp.float32)
    basis = pos & (DIM - 1)            # amplitude index within each 16-lane group

    # use_pos[q]: True where roll(+stride) delivers the XOR-by-stride partner
    # (derived from a rolled iota -> independent of the roll-direction convention).
    use_pos = []
    for q in range(N_QUBITS):
        stride = 1 << (N_QUBITS - 1 - q)
        rolled = pltpu.roll(posf, stride, axis=1)
        use_pos.append(rolled == (pos ^ stride).astype(jnp.float32))

    # sign for the half-matrix complex recombination: -1 on re half, +1 on im half
    imsign = jnp.where(pos < HALF, -1.0, 1.0).astype(jnp.float32)

    def partner(a, q):
        # a[..., p] -> a[..., p XOR stride] via two XLU lane rolls + one select.
        stride = 1 << (N_QUBITS - 1 - q)
        return jnp.where(use_pos[q],
                         pltpu.roll(a, stride, axis=1),
                         pltpu.roll(a, LN - stride, axis=1))

    # |0...0> for every packed batch element (Re = 1 at basis index 0, Im = 0).
    # Kept at (1, LN); broadcasts to (TR, LN) at the first gate update.
    st = jnp.where((basis == 0) & (pos < HALF), 1.0, 0.0).astype(jnp.float32)

    for l in range(DRC_LAYERS):
        # data re-uploading: RY(input_params[l, q] * x[b, l*Q + q]) on wire q.
        # cos/sin of the half-angles are precomputed in the wrapper; the per-wire
        # RY sign mask is already baked into sin_ref. RY is real, so it acts
        # identically on the re and im lane halves -> duplicate with a lane-concat.
        for q in range(N_QUBITS):
            k = l * N_QUBITS + q
            c = cos_ref[k]                               # (TR, HALF)
            s = sin_ref[k]                               # sign-folded sin
            c2 = jnp.concatenate([c, c], axis=-1)        # (TR, LN)
            s2 = jnp.concatenate([s, s], axis=-1)
            st = c2 * st + s2 * partner(st, q)

        # folded StronglyEntanglingLayers layer (Rot on every wire + CNOT ring):
        # w_ref[l] = [kron(I8, Re(u).T) | kron(I8, Im(u).T)]  (128, 256) bf16.
        #   pr = [re@mr | re@mi],  pi = [im@mr | im@mi]
        #   new state = [re@mr - im@mi | re@mi + im@mr] = pr + imsign*roll(pi, HALF)
        sr = st[:, :HALF].astype(jnp.bfloat16)
        si = st[:, HALF:].astype(jnp.bfloat16)
        pr = jnp.dot(sr, w_ref[l], preferred_element_type=jnp.float32)
        pi = jnp.dot(si, w_ref[l], preferred_element_type=jnp.float32)
        st = pr + imsign * pltpu.roll(pi, HALF, axis=1)

    out_ref[...] = st


# ------------------- wrapper-side parameter folding -------------------------
def _rz(a):
    a = a.astype(jnp.complex64)
    e = jnp.exp(-0.5j * a)
    z = jnp.zeros((), jnp.complex64)
    return jnp.stack([jnp.stack([e, z]), jnp.stack([z, jnp.conj(e)])])


def _ry(a):
    c = jnp.cos(0.5 * a).astype(jnp.complex64)
    s = jnp.sin(0.5 * a).astype(jnp.complex64)
    return jnp.stack([jnp.stack([c, -s]), jnp.stack([s, c])])


def _embed(m2, q):
    # wire q acts on the bit of significance 2**(N_QUBITS-1-q) (PennyLane big-endian).
    return jnp.kron(jnp.kron(jnp.eye(1 << q, dtype=jnp.complex64), m2),
                    jnp.eye(1 << (N_QUBITS - 1 - q), dtype=jnp.complex64))


def _cnot_ring():
    idx = np.arange(DIM)
    ring = np.eye(DIM, dtype=np.complex64)
    for q in range(N_QUBITS):
        t = (q + 1) % N_QUBITS
        sc = 1 << (N_QUBITS - 1 - q)
        stt = 1 << (N_QUBITS - 1 - t)
        src = np.where(idx & sc, idx ^ stt, idx)
        p = np.zeros((DIM, DIM), np.complex64)
        p[src, idx] = 1.0
        ring = p @ ring
    return jnp.asarray(ring)


def _layer_unitaries(weights):
    """Fold the batch-independent part of each layer (Rot on every wire + CNOT ring)
    into a single 16x16 unitary, expressed as the top block-row of the real
    block-diagonal form acting on lane-packed [re | im] rows: (L, 128, 256), bf16."""
    ring = _cnot_ring()
    eye_g = jnp.eye(GROUPS, dtype=jnp.float32)
    weights = weights.astype(jnp.float32)
    ws = []
    for l in range(DRC_LAYERS):
        a = jnp.eye(DIM, dtype=jnp.complex64)
        for q in range(N_QUBITS):
            phi, th, om = weights[l, q, 0], weights[l, q, 1], weights[l, q, 2]
            a = _embed(_rz(om) @ _ry(th) @ _rz(phi), q) @ a
        u = ring @ a                                    # (16,16) layer unitary
        mr = jnp.kron(eye_g, jnp.real(u).T.astype(jnp.float32))   # (128,128)
        mi = jnp.kron(eye_g, jnp.imag(u).T.astype(jnp.float32))
        ws.append(jnp.concatenate([mr, mi], axis=1))    # (128, 256)
    return jnp.stack(ws).astype(jnp.bfloat16)           # (L, 128, 256) bf16


# ------------------------------- wrapper -------------------------------------
def quantum_head(x, input_params, weights):
    """x: (B, INPUT_SIZE) float32 -> (B, 2**N_QUBITS) complex64 statevector."""
    B = x.shape[0]
    x = x.astype(jnp.float32)

    # --- tile sizing: full 8-sublane groups, big tiles, >=2 steps when rows>=16 ---
    rows_needed = _cdiv(B, GROUPS)
    if rows_needed <= 8:
        tile_rows = 8                                   # single grid step
    else:
        # at least 2 grid steps so v7x's 2 TensorCores both get work; tiles are a
        # multiple of 8 sublanes and capped by the VMEM-budgeted MAX_TILE_ROWS.
        tile_rows = min(MAX_TILE_ROWS, _round_up(_cdiv(rows_needed, 2), 8))
    num_tiles = max(1, _cdiv(rows_needed, tile_rows))
    rows = num_tiles * tile_rows                        # padded row count
    b_pad = rows * GROUPS
    if b_pad != B:
        x = jnp.concatenate(
            [x, jnp.zeros((b_pad - B, INPUT_SIZE), jnp.float32)], axis=0)

    # --- precompute RY half-angle cos/sin on compact data (no in-kernel trig) ---
    ip = input_params.reshape(1, INPUT_SIZE).astype(jnp.float32)
    half = x * (ip * 0.5)                               # (b_pad, 8)
    cos_h = jnp.cos(half)
    sin_h = jnp.sin(half)

    # per-wire RY sign mask baked into sin (feature k acts on wire k % N_QUBITS)
    amp = np.arange(DIM)
    sgn = np.stack([np.where(amp & (1 << (N_QUBITS - 1 - q)), 1.0, -1.0)
                    for q in range(N_QUBITS)]).astype(np.float32)   # (4, 16)
    sgn_full = jnp.asarray(np.tile(sgn, (DRC_LAYERS, GROUPS)))      # (8, 128)

    def pack(v):   # (b_pad, INPUT_SIZE) -> (INPUT_SIZE, rows, 128) lane-packed
        vg = jnp.transpose(v.reshape(rows, GROUPS, INPUT_SIZE), (2, 0, 1))
        return jnp.repeat(vg, DIM, axis=2)

    cos_e = pack(cos_h)                                 # (8, rows, 128)
    sin_e = pack(sin_h) * sgn_full[:, None, :]          # (8, rows, 128)

    w = _layer_unitaries(weights)                       # (L, 128, 256) bf16

    packed = pl.pallas_call(
        _quantum_head_kernel,
        out_shape=jax.ShapeDtypeStruct((rows, LANES), jnp.float32),
        grid=(num_tiles,),
        in_specs=[
            pl.BlockSpec((INPUT_SIZE, tile_rows, HALF_LANES),
                         lambda i: (0, i, 0)),                       # cos_e
            pl.BlockSpec((INPUT_SIZE, tile_rows, HALF_LANES),
                         lambda i: (0, i, 0)),                       # sin_e
            pl.BlockSpec((DRC_LAYERS, HALF_LANES, LANES),
                         lambda i: (0, 0, 0)),                       # w (constant)
        ],
        out_specs=pl.BlockSpec((tile_rows, LANES), lambda i: (i, 0)),
        compiler_params=pltpu.CompilerParams(
            dimension_semantics=("parallel",),
            vmem_limit_bytes=32 * 1024 * 1024),
    )(cos_e, sin_e, w)

    re = packed[:, :HALF_LANES].reshape(b_pad, DIM)
    im = packed[:, HALF_LANES:].reshape(b_pad, DIM)
    return (re[:B] + 1j * im[:B]).astype(jnp.complex64)


# ---------------- pure-numpy reference (kron-based, float64) -----------------
def _reference_state(x, ip, w):
    B = x.shape[0]
    Q, L = N_QUBITS, DRC_LAYERS
    x = x.astype(np.float64)
    ip = ip.astype(np.float64)
    w = w.astype(np.float64)

    def one_qubit(M, q):
        return np.kron(np.kron(np.eye(2 ** q), M), np.eye(2 ** (Q - 1 - q)))

    def RY(t):
        c, s = np.cos(t / 2), np.sin(t / 2)
        return np.array([[c, -s], [s, c]], dtype=np.complex128)

    def RZ(p):
        return np.array([[np.exp(-1j * p / 2), 0], [0, np.exp(1j * p / 2)]],
                        dtype=np.complex128)

    def CNOT(ctrl, tgt):
        U = np.zeros((DIM, DIM), np.complex128)
        sc = 1 << (Q - 1 - ctrl)
        st = 1 << (Q - 1 - tgt)
        for i in range(DIM):
            j = i ^ st if (i & sc) else i
            U[j, i] = 1.0
        return U

    out = np.zeros((B, DIM), np.complex128)
    for b in range(B):
        state = np.zeros(DIM, np.complex128)
        state[0] = 1.0
        for l in range(L):
            for q in range(Q):
                theta = ip[l, q] * x[b, l * Q + q]
                state = one_qubit(RY(theta), q) @ state
            for q in range(Q):
                phi, th, om = w[l, q]
                R = RZ(om) @ RY(th) @ RZ(phi)
                state = one_qubit(R, q) @ state
            for q in range(Q):
                state = CNOT(q, (q + 1) % Q) @ state
        out[b] = state
    return out


if __name__ == "__main__":
    key = jax.random.PRNGKey(0)
    kx, kp, kw = jax.random.split(key, 3)
    x = jax.random.normal(kx, (BATCH, INPUT_SIZE), jnp.float32)
    # torch.nn.init.normal_ -> N(0, 1) for both parameter tensors
    input_params = jax.random.normal(kp, (DRC_LAYERS, N_QUBITS), jnp.float32)
    weights = jax.random.normal(kw, (DRC_LAYERS, N_QUBITS, 3), jnp.float32)

    state = jax.block_until_ready(quantum_head(x, input_params, weights))
    assert state.shape == (BATCH, DIM) and state.dtype == jnp.complex64

    ref = _reference_state(np.asarray(x), np.asarray(input_params),
                           np.asarray(weights))
    # tolerance covers bf16 MXU-operand rounding compounded over the two folded
    # layer unitaries (f32 accumulation), plus generation-dependent contraction order
    np.testing.assert_allclose(np.asarray(state), ref, rtol=1e-2, atol=1e-2)
    np.testing.assert_allclose(
        np.sum(np.abs(np.asarray(state)) ** 2, axis=-1), 1.0, atol=2e-2)
    print("KERNEL_OK")
</pallas_src>

<mosaic_0001>
module attributes {stable_mosaic.version = 11 : i64} {
  func.func @_quantum_head_kernel(%arg0: i32, %arg1: memref<8x8x128xf32, #tpu.memory_space<vmem>>, %arg2: memref<8x8x128xf32, #tpu.memory_space<vmem>>, %arg3: memref<2x128x256xbf16, #tpu.memory_space<vmem>>, %arg4: memref<8x256xf32, #tpu.memory_space<vmem>>) attributes {dimension_semantics = [#tpu.dimension_semantics<parallel>], iteration_bounds = array<i64: 1>, scalar_prefetch = 0 : i64, scratch_operands = 0 : i64, tpu.core_type = #tpu.core_type<tc>, window_params = [{transform_indices = @transform_0, window_bounds = array<i64: 8, 8, 128>}, {transform_indices = @transform_1, window_bounds = array<i64: 8, 8, 128>}, {pipeline_mode = #tpu.pipeline_mode<synchronous>, transform_indices = @transform_2, window_bounds = array<i64: 2, 128, 256>}, {transform_indices = @transform_3, window_bounds = array<i64: 8, 256>}]} {
    %0 = tpu.iota {dimensions = array<i32: 1>} : vector<1x256xi32>
    %1 = arith.sitofp %0 : vector<1x256xi32> to vector<1x256xf32>
    %c15_i32 = arith.constant 15 : i32
    %2 = vector.broadcast %c15_i32 : i32 to vector<1x256xi32>
    %3 = arith.andi %0, %2 : vector<1x256xi32>
    %c8_i32 = arith.constant 8 : i32
    %4 = tpu.dynamic_rotate %1 by %c8_i32 dim 1 : vector<1x256xf32>, i32 -> vector<1x256xf32>
    %c8_i32_0 = arith.constant 8 : i32
    %5 = vector.broadcast %c8_i32_0 : i32 to vector<1x256xi32>
    %6 = arith.xori %0, %5 : vector<1x256xi32>
    %7 = arith.sitofp %6 : vector<1x256xi32> to vector<1x256xf32>
    %8 = arith.cmpf oeq, %4, %7 : vector<1x256xf32>
    %c4_i32 = arith.constant 4 : i32
    %9 = tpu.dynamic_rotate %1 by %c4_i32 dim 1 : vector<1x256xf32>, i32 -> vector<1x256xf32>
    %c4_i32_1 = arith.constant 4 : i32
    %10 = vector.broadcast %c4_i32_1 : i32 to vector<1x256xi32>
    %11 = arith.xori %0, %10 : vector<1x256xi32>
    %12 = arith.sitofp %11 : vector<1x256xi32> to vector<1x256xf32>
    %13 = arith.cmpf oeq, %9, %12 : vector<1x256xf32>
    %c2_i32 = arith.constant 2 : i32
    %14 = tpu.dynamic_rotate %1 by %c2_i32 dim 1 : vector<1x256xf32>, i32 -> vector<1x256xf32>
    %c2_i32_2 = arith.constant 2 : i32
    %15 = vector.broadcast %c2_i32_2 : i32 to vector<1x256xi32>
    %16 = arith.xori %0, %15 : vector<1x256xi32>
    %17 = arith.sitofp %16 : vector<1x256xi32> to vector<1x256xf32>
    %18 = arith.cmpf oeq, %14, %17 : vector<1x256xf32>
    %c1_i32 = arith.constant 1 : i32
    %19 = tpu.dynamic_rotate %1 by %c1_i32 dim 1 : vector<1x256xf32>, i32 -> vector<1x256xf32>
    %c1_i32_3 = arith.constant 1 : i32
    %20 = vector.broadcast %c1_i32_3 : i32 to vector<1x256xi32>
    %21 = arith.xori %0, %20 : vector<1x256xi32>
    %22 = arith.sitofp %21 : vector<1x256xi32> to vector<1x256xf32>
    %23 = arith.cmpf oeq, %19, %22 : vector<1x256xf32>
    %c128_i32 = arith.constant 128 : i32
    %24 = vector.broadcast %c128_i32 : i32 to vector<1x256xi32>
    %25 = arith.cmpi slt, %0, %24 : vector<1x256xi32>
    %cst = arith.constant -1.000000e+00 : f32
    %cst_4 = arith.constant 1.000000e+00 : f32
    %26 = vector.broadcast %cst : f32 to vector<1x256xf32>
    %27 = vector.broadcast %cst_4 : f32 to vector<1x256xf32>
    %28 = arith.select %25, %26, %27 : vector<1x256xi1>, vector<1x256xf32>
    %c0_i32 = arith.constant 0 : i32
    %29 = vector.broadcast %c0_i32 : i32 to vector<1x256xi32>
    %30 = arith.cmpi eq, %3, %29 : vector<1x256xi32>
    %c128_i32_5 = arith.constant 128 : i32
    %31 = vector.broadcast %c128_i32_5 : i32 to vector<1x256xi32>
    %32 = arith.cmpi slt, %0, %31 : vector<1x256xi32>
    %33 = arith.andi %30, %32 : vector<1x256xi1>
    %cst_6 = arith.constant 1.000000e+00 : f32
    %cst_7 = arith.constant 0.000000e+00 : f32
    %34 = vector.broadcast %cst_6 : f32 to vector<1x256xf32>
    %35 = vector.broadcast %cst_7 : f32 to vector<1x256xf32>
    %36 = arith.select %33, %34, %35 : vector<1x256xi1>, vector<1x256xf32>
    %c0 = arith.constant 0 : index
    %c0_8 = arith.constant 0 : index
    %c0_9 = arith.constant 0 : index
    %37 = vector.load %arg1[%c0, %c0_8, %c0_9] : memref<8x8x128xf32, #tpu.memory_space<vmem>>, vector<1x8x128xf32>
    %38 = vector.shape_cast %37 : vector<1x8x128xf32> to vector<8x128xf32>
    %c0_10 = arith.constant 0 : index
    %c0_11 = arith.constant 0 : index
    %c0_12 = arith.constant 0 : index
    %39 = vector.load %arg2[%c0_10, %c0_11, %c0_12] : memref<8x8x128xf32, #tpu.memory_space<vmem>>, vector<1x8x128xf32>
    %40 = vector.shape_cast %39 : vector<1x8x128xf32> to vector<8x128xf32>
    %41 = tpu.concatenate %38, %38 in 1 : vector<8x128xf32>, vector<8x128xf32> -> vector<8x256xf32>
    %42 = tpu.concatenate %40, %40 in 1 : vector<8x128xf32>, vector<8x128xf32> -> vector<8x256xf32>
    %43 = vector.broadcast %36 : vector<1x256xf32> to vector<8x256xf32>
    %44 = arith.mulf %41, %43 : vector<8x256xf32>
    %c8_i32_13 = arith.constant 8 : i32
    %45 = tpu.dynamic_rotate %36 by %c8_i32_13 dim 1 : vector<1x256xf32>, i32 -> vector<1x256xf32>
    %c248_i32 = arith.constant 248 : i32
    %46 = tpu.dynamic_rotate %36 by %c248_i32 dim 1 : vector<1x256xf32>, i32 -> vector<1x256xf32>
    %47 = arith.select %8, %45, %46 : vector<1x256xi1>, vector<1x256xf32>
    %48 = vector.broadcast %47 : vector<1x256xf32> to vector<8x256xf32>
    %49 = arith.mulf %42, %48 : vector<8x256xf32>
    %50 = arith.addf %44, %49 : vector<8x256xf32>
    %c1 = arith.constant 1 : index
    %c0_14 = arith.constant 0 : index
    %c0_15 = arith.constant 0 : index
    %51 = vector.load %arg1[%c1, %c0_14, %c0_15] : memref<8x8x128xf32, #tpu.memory_space<vmem>>, vector<1x8x128xf32>
    %52 = vector.shape_cast %51 : vector<1x8x128xf32> to vector<8x128xf32>
    %c1_16 = arith.constant 1 : index
    %c0_17 = arith.constant 0 : index
    %c0_18 = arith.constant 0 : index
    %53 = vector.load %arg2[%c1_16, %c0_17, %c0_18] : memref<8x8x128xf32, #tpu.memory_space<vmem>>, vector<1x8x128xf32>
    %54 = vector.shape_cast %53 : vector<1x8x128xf32> to vector<8x128xf32>
    %55 = tpu.concatenate %52, %52 in 1 : vector<8x128xf32>, vector<8x128xf32> -> vector<8x256xf32>
    %56 = tpu.concatenate %54, %54 in 1 : vector<8x128xf32>, vector<8x128xf32> -> vector<8x256xf32>
    %57 = arith.mulf %55, %50 : vector<8x256xf32>
    %c4_i32_19 = arith.constant 4 : i32
    %58 = tpu.dynamic_rotate %50 by %c4_i32_19 dim 1 : vector<8x256xf32>, i32 -> vector<8x256xf32>
    %c252_i32 = arith.constant 252 : i32
    %59 = tpu.dynamic_rotate %50 by %c252_i32 dim 1 : vector<8x256xf32>, i32 -> vector<8x256xf32>
    %60 = vector.shape_cast %13 : vector<1x256xi1> to vector<1x256xi1>
    %61 = vector.broadcast %60 : vector<1x256xi1> to vector<8x256xi1>
    %62 = arith.select %61, %58, %59 : vector<8x256xi1>, vector<8x256xf32>
    %63 = arith.mulf %56, %62 : vector<8x256xf32>
    %64 = arith.addf %57, %63 : vector<8x256xf32>
    %c2 = arith.constant 2 : index
    %c0_20 = arith.constant 0 : index
    %c0_21 = arith.constant 0 : index
    %65 = vector.load %arg1[%c2, %c0_20, %c0_21] : memref<8x8x128xf32, #tpu.memory_space<vmem>>, vector<1x8x128xf32>
    %66 = vector.shape_cast %65 : vector<1x8x128xf32> to vector<8x128xf32>
    %c2_22 = arith.constant 2 : index
    %c0_23 = arith.constant 0 : index
    %c0_24 = arith.constant 0 : index
    %67 = vector.load %arg2[%c2_22, %c0_23, %c0_24] : memref<8x8x128xf32, #tpu.memory_space<vmem>>, vector<1x8x128xf32>
    %68 = vector.shape_cast %67 : vector<1x8x128xf32> to vector<8x128xf32>
    %69 = tpu.concatenate %66, %66 in 1 : vector<8x128xf32>, vector<8x128xf32> -> vector<8x256xf32>
    %70 = tpu.concatenate %68, %68 in 1 : vector<8x128xf32>, vector<8x128xf32> -> vector<8x256xf32>
    %71 = arith.mulf %69, %64 : vector<8x256xf32>
    %c2_i32_25 = arith.constant 2 : i32
    %72 = tpu.dynamic_rotate %64 by %c2_i32_25 dim 1 : vector<8x256xf32>, i32 -> vector<8x256xf32>
    %c254_i32 = arith.constant 254 : i32
    %73 = tpu.dynamic_rotate %64 by %c254_i32 dim 1 : vector<8x256xf32>, i32 -> vector<8x256xf32>
    %74 = vector.shape_cast %18 : vector<1x256xi1> to vector<1x256xi1>
    %75 = vector.broadcast %74 : vector<1x256xi1> to vector<8x256xi1>
    %76 = arith.select %75, %72, %73 : vector<8x256xi1>, vector<8x256xf32>
    %77 = arith.mulf %70, %76 : vector<8x256xf32>
    %78 = arith.addf %71, %77 : vector<8x256xf32>
    %c3 = arith.constant 3 : index
    %c0_26 = arith.constant 0 : index
    %c0_27 = arith.constant 0 : index
    %79 = vector.load %arg1[%c3, %c0_26, %c0_27] : memref<8x8x128xf32, #tpu.memory_space<vmem>>, vector<1x8x128xf32>
    %80 = vector.shape_cast %79 : vector<1x8x128xf32> to vector<8x128xf32>
    %c3_28 = arith.constant 3 : index
    %c0_29 = arith.constant 0 : index
    %c0_30 = arith.constant 0 : index
    %81 = vector.load %arg2[%c3_28, %c0_29, %c0_30] : memref<8x8x128xf32, #tpu.memory_space<vmem>>, vector<1x8x128xf32>
    %82 = vector.shape_cast %81 : vector<1x8x128xf32> to vector<8x128xf32>
    %83 = tpu.concatenate %80, %80 in 1 : vector<8x128xf32>, vector<8x128xf32> -> vector<8x256xf32>
    %84 = tpu.concatenate %82, %82 in 1 : vector<8x128xf32>, vector<8x128xf32> -> vector<8x256xf32>
    %85 = arith.mulf %83, %78 : vector<8x256xf32>
    %c1_i32_31 = arith.constant 1 : i32
    %86 = tpu.dynamic_rotate %78 by %c1_i32_31 dim 1 : vector<8x256xf32>, i32 -> vector<8x256xf32>
    %c255_i32 = arith.constant 255 : i32
    %87 = tpu.dynamic_rotate %78 by %c255_i32 dim 1 : vector<8x256xf32>, i32 -> vector<8x256xf32>
    %88 = vector.shape_cast %23 : vector<1x256xi1> to vector<1x256xi1>
    %89 = vector.broadcast %88 : vector<1x256xi1> to vector<8x256xi1>
    %90 = arith.select %89, %86, %87 : vector<8x256xi1>, vector<8x256xf32>
    %91 = arith.mulf %84, %90 : vector<8x256xf32>
    %92 = arith.addf %85, %91 : vector<8x256xf32>
    %93 = vector.extract_strided_slice %92 {offsets = [0, 0], sizes = [8, 128], strides = [1, 1]} : vector<8x256xf32> to vector<8x128xf32>
    %94 = arith.truncf %93 : vector<8x128xf32> to vector<8x128xbf16>
    %95 = vector.extract_strided_slice %92 {offsets = [0, 128], sizes = [8, 128], strides = [1, 1]} : vector<8x256xf32> to vector<8x128xf32>
    %96 = arith.truncf %95 : vector<8x128xf32> to vector<8x128xbf16>
    %c0_32 = arith.constant 0 : index
    %c0_33 = arith.constant 0 : index
    %c0_34 = arith.constant 0 : index
    %97 = vector.load %arg3[%c0_32, %c0_33, %c0_34] : memref<2x128x256xbf16, #tpu.memory_space<vmem>>, vector<1x128x256xbf16>
    %98 = vector.shape_cast %97 : vector<1x128x256xbf16> to vector<128x256xbf16>
    %cst_35 = arith.constant dense<0.000000e+00> : vector<8x256xf32>
    %99 = tpu.matmul %94, %98, %cst_35 {dimension_numbers = #tpu.dot_dimension_numbers<[1], [0], [0], [1], [0, 0, 1, 1], [], []>} : vector<8x128xbf16>, vector<128x256xbf16>, vector<8x256xf32> -> vector<8x256xf32>
    %c0_36 = arith.constant 0 : index
    %c0_37 = arith.constant 0 : index
    %c0_38 = arith.constant 0 : index
    %100 = vector.load %arg3[%c0_36, %c0_37, %c0_38] : memref<2x128x256xbf16, #tpu.memory_space<vmem>>, vector<1x128x256xbf16>
    %101 = vector.shape_cast %100 : vector<1x128x256xbf16> to vector<128x256xbf16>
    %cst_39 = arith.constant dense<0.000000e+00> : vector<8x256xf32>
    %102 = tpu.matmul %96, %101, %cst_39 {dimension_numbers = #tpu.dot_dimension_numbers<[1], [0], [0], [1], [0, 0, 1, 1], [], []>} : vector<8x128xbf16>, vector<128x256xbf16>, vector<8x256xf32> -> vector<8x256xf32>
    %c128_i32_40 = arith.constant 128 : i32
    %103 = tpu.dynamic_rotate %102 by %c128_i32_40 dim 1 : vector<8x256xf32>, i32 -> vector<8x256xf32>
    %104 = vector.broadcast %28 : vector<1x256xf32> to vector<8x256xf32>
    %105 = arith.mulf %104, %103 : vector<8x256xf32>
    %106 = arith.addf %99, %105 : vector<8x256xf32>
    %c4 = arith.constant 4 : index
    %c0_41 = arith.constant 0 : index
    %c0_42 = arith.constant 0 : index
    %107 = vector.load %arg1[%c4, %c0_41, %c0_42] : memref<8x8x128xf32, #tpu.memory_space<vmem>>, vector<1x8x128xf32>
    %108 = vector.shape_cast %107 : vector<1x8x128xf32> to vector<8x128xf32>
    %c4_43 = arith.constant 4 : index
    %c0_44 = arith.constant 0 : index
    %c0_45 = arith.constant 0 : index
    %109 = vector.load %arg2[%c4_43, %c0_44, %c0_45] : memref<8x8x128xf32, #tpu.memory_space<vmem>>, vector<1x8x128xf32>
    %110 = vector.shape_cast %109 : vector<1x8x128xf32> to vector<8x128xf32>
    %111 = tpu.concatenate %108, %108 in 1 : vector<8x128xf32>, vector<8x128xf32> -> vector<8x256xf32>
    %112 = tpu.concatenate %110, %110 in 1 : vector<8x128xf32>, vector<8x128xf32> -> vector<8x256xf32>
    %113 = arith.mulf %111, %106 : vector<8x256xf32>
    %c8_i32_46 = arith.constant 8 : i32
    %114 = tpu.dynamic_rotate %106 by %c8_i32_46 dim 1 : vector<8x256xf32>, i32 -> vector<8x256xf32>
    %c248_i32_47 = arith.constant 248 : i32
    %115 = tpu.dynamic_rotate %106 by %c248_i32_47 dim 1 : vector<8x256xf32>, i32 -> vector<8x256xf32>
    %116 = vector.shape_cast %8 : vector<1x256xi1> to vector<1x256xi1>
    %117 = vector.broadcast %116 : vector<1x256xi1> to vector<8x256xi1>
    %118 = arith.select %117, %114, %115 : vector<8x256xi1>, vector<8x256xf32>
    %119 = arith.mulf %112, %118 : vector<8x256xf32>
    %120 = arith.addf %113, %119 : vector<8x256xf32>
    %c5 = arith.constant 5 : index
    %c0_48 = arith.constant 0 : index
    %c0_49 = arith.constant 0 : index
    %121 = vector.load %arg1[%c5, %c0_48, %c0_49] : memref<8x8x128xf32, #tpu.memory_space<vmem>>, vector<1x8x128xf32>
    %122 = vector.shape_cast %121 : vector<1x8x128xf32> to vector<8x128xf32>
    %c5_50 = arith.constant 5 : index
    %c0_51 = arith.constant 0 : index
    %c0_52 = arith.constant 0 : index
    %123 = vector.load %arg2[%c5_50, %c0_51, %c0_52] : memref<8x8x128xf32, #tpu.memory_space<vmem>>, vector<1x8x128xf32>
    %124 = vector.shape_cast %123 : vector<1x8x128xf32> to vector<8x128xf32>
    %125 = tpu.concatenate %122, %122 in 1 : vector<8x128xf32>, vector<8x128xf32> -> vector<8x256xf32>
    %126 = tpu.concatenate %124, %124 in 1 : vector<8x128xf32>, vector<8x128xf32> -> vector<8x256xf32>
    %127 = arith.mulf %125, %120 : vector<8x256xf32>
    %c4_i32_53 = arith.constant 4 : i32
    %128 = tpu.dynamic_rotate %120 by %c4_i32_53 dim 1 : vector<8x256xf32>, i32 -> vector<8x256xf32>
    %c252_i32_54 = arith.constant 252 : i32
    %129 = tpu.dynamic_rotate %120 by %c252_i32_54 dim 1 : vector<8x256xf32>, i32 -> vector<8x256xf32>
    %130 = vector.shape_cast %13 : vector<1x256xi1> to vector<1x256xi1>
    %131 = vector.broadcast %130 : vector<1x256xi1> to vector<8x256xi1>
    %132 = arith.select %131, %128, %129 : vector<8x256xi1>, vector<8x256xf32>
    %133 = arith.mulf %126, %132 : vector<8x256xf32>
    %134 = arith.addf %127, %133 : vector<8x256xf32>
    %c6 = arith.constant 6 : index
    %c0_55 = arith.constant 0 : index
    %c0_56 = arith.constant 0 : index
    %135 = vector.load %arg1[%c6, %c0_55, %c0_56] : memref<8x8x128xf32, #tpu.memory_space<vmem>>, vector<1x8x128xf32>
    %136 = vector.shape_cast %135 : vector<1x8x128xf32> to vector<8x128xf32>
    %c6_57 = arith.constant 6 : index
    %c0_58 = arith.constant 0 : index
    %c0_59 = arith.constant 0 : index
    %137 = vector.load %arg2[%c6_57, %c0_58, %c0_59] : memref<8x8x128xf32, #tpu.memory_space<vmem>>, vector<1x8x128xf32>
    %138 = vector.shape_cast %137 : vector<1x8x128xf32> to vector<8x128xf32>
    %139 = tpu.concatenate %136, %136 in 1 : vector<8x128xf32>, vector<8x128xf32> -> vector<8x256xf32>
    %140 = tpu.concatenate %138, %138 in 1 : vector<8x128xf32>, vector<8x128xf32> -> vector<8x256xf32>
    %141 = arith.mulf %139, %134 : vector<8x256xf32>
    %c2_i32_60 = arith.constant 2 : i32
    %142 = tpu.dynamic_rotate %134 by %c2_i32_60 dim 1 : vector<8x256xf32>, i32 -> vector<8x256xf32>
    %c254_i32_61 = arith.constant 254 : i32
    %143 = tpu.dynamic_rotate %134 by %c254_i32_61 dim 1 : vector<8x256xf32>, i32 -> vector<8x256xf32>
    %144 = vector.shape_cast %18 : vector<1x256xi1> to vector<1x256xi1>
    %145 = vector.broadcast %144 : vector<1x256xi1> to vector<8x256xi1>
    %146 = arith.select %145, %142, %143 : vector<8x256xi1>, vector<8x256xf32>
    %147 = arith.mulf %140, %146 : vector<8x256xf32>
    %148 = arith.addf %141, %147 : vector<8x256xf32>
    %c7 = arith.constant 7 : index
    %c0_62 = arith.constant 0 : index
    %c0_63 = arith.constant 0 : index
    %149 = vector.load %arg1[%c7, %c0_62, %c0_63] : memref<8x8x128xf32, #tpu.memory_space<vmem>>, vector<1x8x128xf32>
    %150 = vector.shape_cast %149 : vector<1x8x128xf32> to vector<8x128xf32>
    %c7_64 = arith.constant 7 : index
    %c0_65 = arith.constant 0 : index
    %c0_66 = arith.constant 0 : index
    %151 = vector.load %arg2[%c7_64, %c0_65, %c0_66] : memref<8x8x128xf32, #tpu.memory_space<vmem>>, vector<1x8x128xf32>
    %152 = vector.shape_cast %151 : vector<1x8x128xf32> to vector<8x128xf32>
    %153 = tpu.concatenate %150, %150 in 1 : vector<8x128xf32>, vector<8x128xf32> -> vector<8x256xf32>
    %154 = tpu.concatenate %152, %152 in 1 : vector<8x128xf32>, vector<8x128xf32> -> vector<8x256xf32>
    %155 = arith.mulf %153, %148 : vector<8x256xf32>
    %c1_i32_67 = arith.constant 1 : i32
    %156 = tpu.dynamic_rotate %148 by %c1_i32_67 dim 1 : vector<8x256xf32>, i32 -> vector<8x256xf32>
    %c255_i32_68 = arith.constant 255 : i32
    %157 = tpu.dynamic_rotate %148 by %c255_i32_68 dim 1 : vector<8x256xf32>, i32 -> vector<8x256xf32>
    %158 = vector.shape_cast %23 : vector<1x256xi1> to vector<1x256xi1>
    %159 = vector.broadcast %158 : vector<1x256xi1> to vector<8x256xi1>
    %160 = arith.select %159, %156, %157 : vector<8x256xi1>, vector<8x256xf32>
    %161 = arith.mulf %154, %160 : vector<8x256xf32>
    %162 = arith.addf %155, %161 : vector<8x256xf32>
    %163 = vector.extract_strided_slice %162 {offsets = [0, 0], sizes = [8, 128], strides = [1, 1]} : vector<8x256xf32> to vector<8x128xf32>
    %164 = arith.truncf %163 : vector<8x128xf32> to vector<8x128xbf16>
    %165 = vector.extract_strided_slice %162 {offsets = [0, 128], sizes = [8, 128], strides = [1, 1]} : vector<8x256xf32> to vector<8x128xf32>
    %166 = arith.truncf %165 : vector<8x128xf32> to vector<8x128xbf16>
    %c1_69 = arith.constant 1 : index
    %c0_70 = arith.constant 0 : index
    %c0_71 = arith.constant 0 : index
    %167 = vector.load %arg3[%c1_69, %c0_70, %c0_71] : memref<2x128x256xbf16, #tpu.memory_space<vmem>>, vector<1x128x256xbf16>
    %168 = vector.shape_cast %167 : vector<1x128x256xbf16> to vector<128x256xbf16>
    %cst_72 = arith.constant dense<0.000000e+00> : vector<8x256xf32>
    %169 = tpu.matmul %164, %168, %cst_72 {dimension_numbers = #tpu.dot_dimension_numbers<[1], [0], [0], [1], [0, 0, 1, 1], [], []>} : vector<8x128xbf16>, vector<128x256xbf16>, vector<8x256xf32> -> vector<8x256xf32>
    %c1_73 = arith.constant 1 : index
    %c0_74 = arith.constant 0 : index
    %c0_75 = arith.constant 0 : index
    %170 = vector.load %arg3[%c1_73, %c0_74, %c0_75] : memref<2x128x256xbf16, #tpu.memory_space<vmem>>, vector<1x128x256xbf16>
    %171 = vector.shape_cast %170 : vector<1x128x256xbf16> to vector<128x256xbf16>
    %cst_76 = arith.constant dense<0.000000e+00> : vector<8x256xf32>
    %172 = tpu.matmul %166, %171, %cst_76 {dimension_numbers = #tpu.dot_dimension_numbers<[1], [0], [0], [1], [0, 0, 1, 1], [], []>} : vector<8x128xbf16>, vector<128x256xbf16>, vector<8x256xf32> -> vector<8x256xf32>
    %c128_i32_77 = arith.constant 128 : i32
    %173 = tpu.dynamic_rotate %172 by %c128_i32_77 dim 1 : vector<8x256xf32>, i32 -> vector<8x256xf32>
    %174 = vector.broadcast %28 : vector<1x256xf32> to vector<8x256xf32>
    %175 = arith.mulf %174, %173 : vector<8x256xf32>
    %176 = arith.addf %169, %175 : vector<8x256xf32>
    %c0_78 = arith.constant 0 : index
    %c0_79 = arith.constant 0 : index
    %177 = vector.load %arg4[%c0_78, %c0_79] : memref<8x256xf32, #tpu.memory_space<vmem>>, vector<8x256xf32>
    tpu.vector_store %arg4[%c0_78, %c0_79], %176 {strides = array<i32>} : memref<8x256xf32, #tpu.memory_space<vmem>>, vector<8x256xf32>,
    return
  }
  func.func @transform_0(%arg0: i32) -> (i32, i32, i32) {
    %c0_i32 = arith.constant 0 : i32
    %c0_i32_0 = arith.constant 0 : i32
    %c0_i32_1 = arith.constant 0 : i32
    return %c0_i32, %arg0, %c0_i32_0 : i32, i32, i32
  }
  func.func @transform_1(%arg0: i32) -> (i32, i32, i32) {
    %c0_i32 = arith.constant 0 : i32
    %c0_i32_0 = arith.constant 0 : i32
    %c0_i32_1 = arith.constant 0 : i32
    return %c0_i32, %arg0, %c0_i32_0 : i32, i32, i32
  }
  func.func @transform_2(%arg0: i32) -> (i32, i32, i32) {
    %c0_i32 = arith.constant 0 : i32
    %c0_i32_0 = arith.constant 0 : i32
    %c0_i32_1 = arith.constant 0 : i32
    %c0_i32_2 = arith.constant 0 : i32
    return %c0_i32, %c0_i32_0, %c0_i32_1 : i32, i32, i32
  }
  func.func @transform_3(%arg0: i32) -> (i32, i32) {
    %c0_i32 = arith.constant 0 : i32
    %c0_i32_0 = arith.constant 0 : i32
    return %arg0, %c0_i32 : i32, i32
  }
}

</mosaic_0001>

<llo_original>
// kernel: tpu_custom_call.1
$region0: #{tpu_custom_call.1}
  #allocation0 [shape = 'u32[]', space=smem, size = 0x4, offset = 0x4, fixed_abs, tag = 'smem constant byte address 0x4 - core index']
  #allocation1 [shape = 'u32[72,128]{1,0:T(1,128)}', space=vmem, size = 0x9000, scoped, tag = 'internal scratch']
  %s0 = inlined_call_operand.hbm [shape: f32[8,8,128], index: 0, kind: input, shape index: {}]
  %s1 = inlined_call_operand.hbm [shape: f32[8,8,128], index: 1, kind: input, shape index: {}]
  %s2 = inlined_call_operand.hbm [shape: bf16[2,128,256], index: 2, kind: input, shape index: {}]
  %s3 = inlined_call_operand.hbm [shape: f32[8,256], index: 3, kind: output, shape index: {}]
  %s4 = sld [smem:[#allocation0]]
  $region34: #{tpu_custom_call.1} parent=0
    _
  %s6 = ssub.s32 1, %s4
  %s7 = scalar_select 0, %s6, %s4
  $region1: #{tpu_custom_call.1} parent=0
    #allocation2 [shape = 'u8[32768]{0}', space=vmem, size = 0x8000, scoped, tag = 'input window, operand 0, single buffered']
    #allocation3 [shape = 's32[1]{0}', space=sflag, size = 0x4, scoped, tag = 'scoped memory for tpu_custom_call.1']
    #allocation4 [shape = 's32[1]{0}', space=sflag, size = 0x4, scoped, tag = 'scoped memory for tpu_custom_call.1']
    #allocation5 [shape = 'u8[32768]{0}', space=vmem, size = 0x8000, scoped, tag = 'input window, operand 1, single buffered']
    #allocation6 [shape = 's32[1]{0}', space=sflag, size = 0x4, scoped, tag = 'scoped memory for tpu_custom_call.1']
    #allocation7 [shape = 'u8[131072]{0}', space=vmem, size = 0x20000, scoped, tag = 'input window, operand 2, single buffered']
    #allocation8 [shape = 'u8[8192]{0}', space=vmem, size = 0x2000, scoped, tag = 'output window, operand 0, single buffered']
    %8 = vsyncpa [#allocation3], 0
    %9 = vsyncpa [#allocation6], 0
    %10 = vsyncpa [#allocation4], 0
    // Predicated region
    $region2: #{tpu_custom_call.1} parent=1 // pred_check
      _
    $region3: #{tpu_custom_call.1} parent=1 // pred_check_branch
      %12 = sbr.rel (0) target = $region5
    $region4: #{tpu_custom_call.1} parent=1 // pred_region
      %14 = vsyncadd [#allocation3], 0
      %s15 = sshll.u32 %s0, 4
      %s16 = int_to_ptr.hbm [resolvable:$true] %s15
      %s17 = sshll.u32 [#allocation2], 4
      %s18 = int_to_ptr.vmem [resolvable:$true] %s17
      %23 = dma.hbm_to_vmem [thread:$0]  %s16, 1024, %s18, [#allocation3], 128, 128, 8
    $region5: #{tpu_custom_call.1} parent=1 // pred_fallthru
      _
    // Predicated region
    $region6: #{tpu_custom_call.1} parent=1 // pred_check
      _
    $region7: #{tpu_custom_call.1} parent=1 // pred_check_branch
      %25 = sbr.rel (0) target = $region9
    $region8: #{tpu_custom_call.1} parent=1 // pred_region
      %27 = vsyncadd [#allocation6], 0
      %s28 = sshll.u32 %s1, 4
      %s29 = int_to_ptr.hbm [resolvable:$true] %s28
      %s30 = sshll.u32 [#allocation5], 4
      %s31 = int_to_ptr.vmem [resolvable:$true] %s30
      %36 = dma.hbm_to_vmem [thread:$0]  %s29, 1024, %s31, [#allocation6], 128, 128, 8
    $region9: #{tpu_custom_call.1} parent=1 // pred_fallthru
      _
    // Predicated region
    $region10: #{tpu_custom_call.1} parent=1 // pred_check
      _
    $region11: #{tpu_custom_call.1} parent=1 // pred_check_branch
      %38 = sbr.rel (0) target = $region13
    $region12: #{tpu_custom_call.1} parent=1 // pred_region
      %40 = vsyncadd [#allocation6], 0
      %s41 = sshll.u32 %s2, 4
      %s42 = int_to_ptr.hbm [resolvable:$true] %s41
      %s43 = sshll.u32 [#allocation7], 4
      %s44 = int_to_ptr.vmem [resolvable:$true] %s43
      %49 = dma.hbm_to_vmem [thread:$0]  %s42, 4096, %s44, [#allocation6], 128, 128, 8
    $region13: #{tpu_custom_call.1} parent=1 // pred_fallthru
      _
    // Predicated region
    $region14: #{tpu_custom_call.1} parent=1 // pred_check
      _
    $region15: #{tpu_custom_call.1} parent=1 // pred_check_branch
      %51 = sbr.rel (0) target = $region17
    $region16: #{tpu_custom_call.1} parent=1 // pred_region
      %53 = dma.done [#allocation3], 1024
    $region17: #{tpu_custom_call.1} parent=1 // pred_fallthru
      _
    // Predicated region
    $region18: #{tpu_custom_call.1} parent=1 // pred_check
      _
    $region19: #{tpu_custom_call.1} parent=1 // pred_check_branch
      %55 = sbr.rel (0) target = $region21
    $region20: #{tpu_custom_call.1} parent=1 // pred_region
      %57 = dma.done [#allocation6], 1024
    $region21: #{tpu_custom_call.1} parent=1 // pred_fallthru
      _
    // Predicated region
    $region22: #{tpu_custom_call.1} parent=1 // pred_check
      _
    $region23: #{tpu_custom_call.1} parent=1 // pred_check_branch
      %59 = sbr.rel (0) target = $region25
    $region24: #{tpu_custom_call.1} parent=1 // pred_region
      %61 = dma.done [#allocation6], 4096
    $region25: #{tpu_custom_call.1} parent=1 // pred_fallthru
      _
    %v62 = vlaneseq
    %v63 = vand.u32 %v62, 127
    %v64 = vadd.s32 %v63, 128
    %v65 = vcvt.s32.f32 %v63
    %v66 = vcvt.s32.f32 %v64
    %v67 = vand.u32 %v63, 15
    %v68 = vand.u32 %v64, 15
    %69 = vrot.lane.b32.xlu0 %v65, 8
    %v70 = vpop.permute.xlu0 %69
    %71 = vrot.lane.b32.xlu0 %v66, 8
    %v72 = vpop.permute.xlu0 %71
    %vm73 = vcmp.lt.s32.totalorder %v63, 8
    %v74 = vsel %vm73, %v70, %v72
    %v75 = vsel %vm73, %v72, %v70
    %v76 = vxor.u32 %v63, 8
    %v77 = vxor.u32 %v64, 8
    %v78 = vcvt.s32.f32 %v76
    %v79 = vcvt.s32.f32 %v77
    %vm80 = vcmp.eq.f32.partialorder %v75, %v78
    %vm81 = vcmp.eq.f32.partialorder %v74, %v79
    %82 = vrot.lane.b32.xlu0 %v65, 4
    %v83 = vpop.permute.xlu0 %82
    %84 = vrot.lane.b32.xlu0 %v66, 4
    %v85 = vpop.permute.xlu0 %84
    %vm86 = vcmp.lt.s32.totalorder %v63, 4
    %v87 = vsel %vm86, %v83, %v85
    %v88 = vsel %vm86, %v85, %v83
    %v89 = vxor.u32 %v63, 4
    %v90 = vxor.u32 %v64, 4
    %v91 = vcvt.s32.f32 %v89
    %v92 = vcvt.s32.f32 %v90
    %vm93 = vcmp.eq.f32.partialorder %v88, %v91
    %vm94 = vcmp.eq.f32.partialorder %v87, %v92
    %95 = vrot.lane.b32.xlu0 %v65, 2
    %v96 = vpop.permute.xlu0 %95
    %97 = vrot.lane.b32.xlu0 %v66, 2
    %v98 = vpop.permute.xlu0 %97
    %vm99 = vcmp.lt.s32.totalorder %v63, 2
    %v100 = vsel %vm99, %v96, %v98
    %v101 = vsel %vm99, %v98, %v96
    %v102 = vxor.u32 %v63, 2
    %v103 = vxor.u32 %v64, 2
    %v104 = vcvt.s32.f32 %v102
    %v105 = vcvt.s32.f32 %v103
    %vm106 = vcmp.eq.f32.partialorder %v101, %v104
    %vm107 = vcmp.eq.f32.partialorder %v100, %v105
    %108 = vrot.lane.b32.xlu0 %v65, 1
    %v109 = vpop.permute.xlu0 %108
    %110 = vrot.lane.b32.xlu0 %v66, 1
    %v111 = vpop.permute.xlu0 %110
    %vm112 = vcmp.lt.s32.totalorder %v63, 1
    %v113 = vsel %vm112, %v109, %v111
    %v114 = vsel %vm112, %v111, %v109
    %v115 = vxor.u32 %v63, 1
    %v116 = vxor.u32 %v64, 1
    %v117 = vcvt.s32.f32 %v115
    %v118 = vcvt.s32.f32 %v116
    %vm119 = vcmp.eq.f32.partialorder %v114, %v117
    %vm120 = vcmp.eq.f32.partialorder %v113, %v118
    %vm121 = vcmp.lt.s32.totalorder %v63, 128
    %vm122 = vcmp.lt.s32.totalorder %v64, 128
    %v123 = vsel %vm121, -1.0, 1.0
    %v124 = vsel %vm122, -1.0, 1.0
    %vm125 = vcmp.eq.s32.totalorder %v67, 0
    %vm126 = vcmp.eq.s32.totalorder %v68, 0
    %vm127 = vmand %vm125, %vm121
    %vm128 = vmand %vm126, %vm122
    %v129 = vsel %vm127, 1.0, 0.0
    %v130 = vsel %vm128, 1.0, 0.0
    %v131 = vld [vmem:[#allocation2] sm:$0xff]
    %v132 = vld [vmem:[#allocation5] sm:$0xff]
    %v133 = vmul.f32 %v131, %v129
    %v134 = vmul.f32 %v131, %v130
    %135 = vrot.lane.b32.xlu0 %v129, 8
    %v136 = vpop.permute.xlu0 %135
    %137 = vrot.lane.b32.xlu0 %v130, 8
    %v138 = vpop.permute.xlu0 %137
    %v139 = vsel %vm73, %v136, %v138
    %v140 = vsel %vm73, %v138, %v136
    %141 = vrot.lane.b32.xlu0 %v129, 120
    %v142 = vpop.permute.xlu0 %141
    %143 = vrot.lane.b32.xlu0 %v130, 120
    %v144 = vpop.permute.xlu0 %143
    %vm145 = vcmp.lt.s32.totalorder %v63, 120
    %v146 = vsel %vm145, %v142, %v144
    %v147 = vsel %vm145, %v144, %v142
    %v148 = vsel %vm80, %v140, %v146
    %v149 = vsel %vm81, %v139, %v147
    %v150 = vperm.slane %v148, 0
    %v151 = vperm.slane %v149, 0
    %v152 = vmul.f32 %v132, %v150
    %v153 = vmul.f32 %v132, %v151
    %v154 = vadd.f32 %v133, %v152
    %v155 = vadd.f32 %v134, %v153
    %s156 = scalar_lea.vmem [#allocation2], 8
    %v157 = vld [vmem:[%s156] sm:$0xff]
    %s158 = scalar_lea.vmem [#allocation5], 8
    %v159 = vld [vmem:[%s158] sm:$0xff]
    %v160 = vmul.f32 %v157, %v154
    %v161 = vmul.f32 %v157, %v155
    %162 = vrot.lane.b32.xlu0 %v154, 4
    %v163 = vpop.permute.xlu0 %162
    %164 = vrot.lane.b32.xlu0 %v155, 4
    %v165 = vpop.permute.xlu0 %164
    %v166 = vsel %vm86, %v163, %v165
    %v167 = vsel %vm86, %v165, %v163
    %168 = vrot.lane.b32.xlu0 %v154, 124
    %v169 = vpop.permute.xlu0 %168
    %170 = vrot.lane.b32.xlu0 %v155, 124
    %v171 = vpop.permute.xlu0 %170
    %vm172 = vcmp.lt.s32.totalorder %v63, 124
    %v173 = vsel %vm172, %v169, %v171
    %v174 = vsel %vm172, %v171, %v169
    %v175 = vsel %vm93, 1, 0
    %v176 = vsel %vm94, 1, 0
    %v177 = vperm.slane %v175, 0
    %v178 = vperm.slane %v176, 0
    %vm179 = vcmp.eq.s32.totalorder %v177, 1
    %vm180 = vcmp.eq.s32.totalorder %v178, 1
    %v181 = vsel %vm179, %v167, %v173
    %v182 = vsel %vm180, %v166, %v174
    %v183 = vmul.f32 %v159, %v181
    %v184 = vmul.f32 %v159, %v182
    %v185 = vadd.f32 %v160, %v183
    %v186 = vadd.f32 %v161, %v184
    %s187 = scalar_lea.vmem [#allocation2], 16
    %v188 = vld [vmem:[%s187] sm:$0xff]
    %s189 = scalar_lea.vmem [#allocation5], 16
    %v190 = vld [vmem:[%s189] sm:$0xff]
    %v191 = vmul.f32 %v188, %v185
    %v192 = vmul.f32 %v188, %v186
    %193 = vrot.lane.b32.xlu0 %v185, 2
    %v194 = vpop.permute.xlu0 %193
    %195 = vrot.lane.b32.xlu0 %v186, 2
    %v196 = vpop.permute.xlu0 %195
    %v197 = vsel %vm99, %v194, %v196
    %v198 = vsel %vm99, %v196, %v194
    %199 = vrot.lane.b32.xlu0 %v185, 126
    %v200 = vpop.permute.xlu0 %199
    %201 = vrot.lane.b32.xlu0 %v186, 126
    %v202 = vpop.permute.xlu0 %201
    %vm203 = vcmp.lt.s32.totalorder %v63, 126
    %v204 = vsel %vm203, %v200, %v202
    %v205 = vsel %vm203, %v202, %v200
    %v206 = vsel %vm106, 1, 0
    %v207 = vsel %vm107, 1, 0
    %v208 = vperm.slane %v206, 0
    %v209 = vperm.slane %v207, 0
    %vm210 = vcmp.eq.s32.totalorder %v208, 1
    %vm211 = vcmp.eq.s32.totalorder %v209, 1
    %v212 = vsel %vm210, %v198, %v204
    %v213 = vsel %vm211, %v197, %v205
    %v214 = vmul.f32 %v190, %v212
    %v215 = vmul.f32 %v190, %v213
    %v216 = vadd.f32 %v191, %v214
    %v217 = vadd.f32 %v192, %v215
    %s218 = scalar_lea.vmem [#allocation2], 24
    %v219 = vld [vmem:[%s218] sm:$0xff]
    %s220 = scalar_lea.vmem [#allocation5], 24
    %v221 = vld [vmem:[%s220] sm:$0xff]
    %v222 = vmul.f32 %v219, %v216
    %v223 = vmul.f32 %v219, %v217
    %224 = vrot.lane.b32.xlu0 %v216, 1
    %v225 = vpop.permute.xlu0 %224
    %226 = vrot.lane.b32.xlu0 %v217, 1
    %v227 = vpop.permute.xlu0 %226
    %v228 = vsel %vm112, %v225, %v227
    %v229 = vsel %vm112, %v227, %v225
    %230 = vrot.lane.b32.xlu0 %v216, 127
    %v231 = vpop.permute.xlu0 %230
    %232 = vrot.lane.b32.xlu0 %v217, 127
    %v233 = vpop.permute.xlu0 %232
    %vm234 = vcmp.lt.s32.totalorder %v63, 127
    %v235 = vsel %vm234, %v231, %v233
    %v236 = vsel %vm234, %v233, %v231
    %v237 = vsel %vm119, 1, 0
    %v238 = vsel %vm120, 1, 0
    %v239 = vperm.slane %v237, 0
    %v240 = vperm.slane %v238, 0
    %vm241 = vcmp.eq.s32.totalorder %v239, 1
    %vm242 = vcmp.eq.s32.totalorder %v240, 1
    %v243 = vsel %vm241, %v229, %v235
    %v244 = vsel %vm242, %v228, %v236
    %v245 = vmul.f32 %v221, %v243
    %v246 = vmul.f32 %v221, %v244
    %v247 = vadd.f32 %v222, %v245
    %v248 = vadd.f32 %v223, %v246
    %v249 = vpack.c.bf16 %v247, %v247
    %v250 = vpack.c.bf16 %v248, %v248
    %v251 = vld [vmem:[#allocation7] sm:$0xff]
    %v252 = vld [vmem:[#allocation7 + $0x8] sm:$0xff]
    %v253 = vld [vmem:[#allocation7 + $0x10] sm:$0xff]
    %v254 = vld [vmem:[#allocation7 + $0x18] sm:$0xff]
    %v255 = vld [vmem:[#allocation7 + $0x20] sm:$0xff]
    %v256 = vld [vmem:[#allocation7 + $0x28] sm:$0xff]
    %v257 = vld [vmem:[#allocation7 + $0x30] sm:$0xff]
    %v258 = vld [vmem:[#allocation7 + $0x38] sm:$0xff]
    %v259 = vld [vmem:[#allocation7 + $0x40] sm:$0xff]
    %v260 = vld [vmem:[#allocation7 + $0x48] sm:$0xff]
    %v261 = vld [vmem:[#allocation7 + $0x50] sm:$0xff]
    %v262 = vld [vmem:[#allocation7 + $0x58] sm:$0xff]
    %v263 = vld [vmem:[#allocation7 + $0x60] sm:$0xff]
    %v264 = vld [vmem:[#allocation7 + $0x68] sm:$0xff]
    %v265 = vld [vmem:[#allocation7 + $0x70] sm:$0xff]
    %v266 = vld [vmem:[#allocation7 + $0x78] sm:$0xff]
    %v283 = vunpack.c.l.b16 %v251
    %v284 = vunpack.c.h.b16 %v251
    %v285 = vunpack.c.l.b16 %v252
    %v286 = vunpack.c.h.b16 %v252
    %v287 = vunpack.c.l.b16 %v253
    %v288 = vunpack.c.h.b16 %v253
    %v289 = vunpack.c.l.b16 %v254
    %v290 = vunpack.c.h.b16 %v254
    %v291 = vunpack.c.l.b16 %v255
    %v292 = vunpack.c.h.b16 %v255
    %v293 = vunpack.c.l.b16 %v256
    %v294 = vunpack.c.h.b16 %v256
    %v295 = vunpack.c.l.b16 %v257
    %v296 = vunpack.c.h.b16 %v257
    %v297 = vunpack.c.l.b16 %v258
    %v298 = vunpack.c.h.b16 %v258
    %v299 = vunpack.c.l.b16 %v259
    %v300 = vunpack.c.h.b16 %v259
    %v301 = vunpack.c.l.b16 %v260
    %v302 = vunpack.c.h.b16 %v260
    %v303 = vunpack.c.l.b16 %v261
    %v304 = vunpack.c.h.b16 %v261
    %v305 = vunpack.c.l.b16 %v262
    %v306 = vunpack.c.h.b16 %v262
    %v307 = vunpack.c.l.b16 %v263
    %v308 = vunpack.c.h.b16 %v263
    %v309 = vunpack.c.l.b16 %v264
    %v310 = vunpack.c.h.b16 %v264
    %v311 = vunpack.c.l.b16 %v265
    %v312 = vunpack.c.h.b16 %v265
    %v313 = vunpack.c.l.b16 %v266
    %v314 = vunpack.c.h.b16 %v266
    %v315 = vpack.c.b16 %v285, %v283
    %v316 = vpack.c.b16 %v286, %v284
    %v317 = vpack.c.b16 %v289, %v287
    %v318 = vpack.c.b16 %v290, %v288
    %v319 = vpack.c.b16 %v293, %v291
    %v320 = vpack.c.b16 %v294, %v292
    %v321 = vpack.c.b16 %v297, %v295
    %v322 = vpack.c.b16 %v298, %v296
    %v323 = vpack.c.b16 %v301, %v299
    %v324 = vpack.c.b16 %v302, %v300
    %v325 = vpack.c.b16 %v305, %v303
    %v326 = vpack.c.b16 %v306, %v304
    %v327 = vpack.c.b16 %v309, %v307
    %v328 = vpack.c.b16 %v310, %v308
    %v329 = vpack.c.b16 %v313, %v311
    %v330 = vpack.c.b16 %v314, %v312
    %347 = vmatpush.bf16.msra.mxu0 %v329
    %348 = vmatpush.bf16.msra.mxu0 %v327
    %349 = vmatpush.bf16.msra.mxu0 %v325
    %350 = vmatpush.bf16.msra.mxu0 %v323
    %351 = vmatpush.bf16.msra.mxu0 %v321
    %352 = vmatpush.bf16.msra.mxu0 %v319
    %353 = vmatpush.bf16.msra.mxu0 %v317
    %354 = vmatpush.bf16.msra.mxu0 %v315
    %355 = vmatmul.bf16.gmra.mxu0 %v250
    %v356 = vpop.f32.mrf.mxu0
    %v357 = vadd.f32 0.0, %v356
    %v358 = vpop.f32.mrf.mxu0
    %359 = vdwg.mxu0
    %360 = vmatpush.bf16.msra.mxu0 %v330
    %361 = vmatpush.bf16.msra.mxu0 %v328
    %362 = vmatpush.bf16.msra.mxu0 %v326
    %363 = vmatpush.bf16.msra.mxu0 %v324
    %364 = vmatpush.bf16.msra.mxu0 %v322
    %365 = vmatpush.bf16.msra.mxu0 %v320
    %366 = vmatpush.bf16.msra.mxu0 %v318
    %367 = vmatpush.bf16.msra.mxu0 %v316
    %368 = vmatmul.bf16.gmra.mxu0 %v250
    %v369 = vpop.f32.mrf.mxu0
    %v370 = vadd.f32 0.0, %v369
    %v371 = vpop.f32.mrf.mxu0
    %372 = vdwg.mxu0
    %v373 = vmul.f32 %v123, %v370
    %v374 = vmul.f32 %v124, %v357
    %375 = vmatpush.bf16.msra.mxu0 %v329
    %376 = vmatpush.bf16.msra.mxu0 %v327
    %377 = vmatpush.bf16.msra.mxu0 %v325
    %378 = vmatpush.bf16.msra.mxu0 %v323
    %379 = vmatpush.bf16.msra.mxu0 %v321
    %380 = vmatpush.bf16.msra.mxu0 %v319
    %381 = vmatpush.bf16.msra.mxu0 %v317
    %382 = vmatpush.bf16.msra.mxu0 %v315
    %383 = vmatmul.bf16.gmra.mxu0 %v249
    %v384 = vpop.f32.mrf.mxu0
    %v385 = vadd.f32 %v373, %v384
    %v386 = vpop.f32.mrf.mxu0
    %387 = vdwg.mxu0
    %388 = vmatpush.bf16.msra.mxu0 %v330
    %389 = vmatpush.bf16.msra.mxu0 %v328
    %390 = vmatpush.bf16.msra.mxu0 %v326
    %391 = vmatpush.bf16.msra.mxu0 %v324
    %392 = vmatpush.bf16.msra.mxu0 %v322
    %393 = vmatpush.bf16.msra.mxu0 %v320
    %394 = vmatpush.bf16.msra.mxu0 %v318
    %395 = vmatpush.bf16.msra.mxu0 %v316
    %396 = vmatmul.bf16.gmra.mxu0 %v249
    %v397 = vpop.f32.mrf.mxu0
    %v398 = vadd.f32 %v374, %v397
    %v399 = vpop.f32.mrf.mxu0
    %400 = vdwg.mxu0
    %s401 = scalar_lea.vmem [#allocation2], 32
    %v402 = vld [vmem:[%s401] sm:$0xff]
    %s403 = scalar_lea.vmem [#allocation5], 32
    %v404 = vld [vmem:[%s403] sm:$0xff]
    %v405 = vmul.f32 %v402, %v385
    %v406 = vmul.f32 %v402, %v398
    %407 = vrot.lane.b32.xlu0 %v385, 8
    %v408 = vpop.permute.xlu0 %407
    %409 = vrot.lane.b32.xlu0 %v398, 8
    %v410 = vpop.permute.xlu0 %409
    %v411 = vsel %vm73, %v408, %v410
    %v412 = vsel %vm73, %v410, %v408
    %413 = vrot.lane.b32.xlu0 %v385, 120
    %v414 = vpop.permute.xlu0 %413
    %415 = vrot.lane.b32.xlu0 %v398, 120
    %v416 = vpop.permute.xlu0 %415
    %v417 = vsel %vm145, %v414, %v416
    %v418 = vsel %vm145, %v416, %v414
    %v419 = vsel %vm80, 1, 0
    %v420 = vsel %vm81, 1, 0
    %v421 = vperm.slane %v419, 0
    %v422 = vperm.slane %v420, 0
    %vm423 = vcmp.eq.s32.totalorder %v421, 1
    %vm424 = vcmp.eq.s32.totalorder %v422, 1
    %v425 = vsel %vm423, %v412, %v417
    %v426 = vsel %vm424, %v411, %v418
    %v427 = vmul.f32 %v404, %v425
    %v428 = vmul.f32 %v404, %v426
    %v429 = vadd.f32 %v405, %v427
    %v430 = vadd.f32 %v406, %v428
    %s431 = scalar_lea.vmem [#allocation2], 40
    %v432 = vld [vmem:[%s431] sm:$0xff]
    %s433 = scalar_lea.vmem [#allocation5], 40
    %v434 = vld [vmem:[%s433] sm:$0xff]
    %v435 = vmul.f32 %v432, %v429
    %v436 = vmul.f32 %v432, %v430
    %437 = vrot.lane.b32.xlu0 %v429, 4
    %v438 = vpop.permute.xlu0 %437
    %439 = vrot.lane.b32.xlu0 %v430, 4
    %v440 = vpop.permute.xlu0 %439
    %v441 = vsel %vm86, %v438, %v440
    %v442 = vsel %vm86, %v440, %v438
    %443 = vrot.lane.b32.xlu0 %v429, 124
    %v444 = vpop.permute.xlu0 %443
    %445 = vrot.lane.b32.xlu0 %v430, 124
    %v446 = vpop.permute.xlu0 %445
    %v447 = vsel %vm172, %v444, %v446
    %v448 = vsel %vm172, %v446, %v444
    %v449 = vsel %vm179, %v442, %v447
    %v450 = vsel %vm180, %v441, %v448
    %v451 = vmul.f32 %v434, %v449
    %v452 = vmul.f32 %v434, %v450
    %v453 = vadd.f32 %v435, %v451
    %v454 = vadd.f32 %v436, %v452
    %s455 = scalar_lea.vmem [#allocation2], 48
    %v456 = vld [vmem:[%s455] sm:$0xff]
    %s457 = scalar_lea.vmem [#allocation5], 48
    %v458 = vld [vmem:[%s457] sm:$0xff]
    %v459 = vmul.f32 %v456, %v453
    %v460 = vmul.f32 %v456, %v454
    %461 = vrot.lane.b32.xlu0 %v453, 2
    %v462 = vpop.permute.xlu0 %461
    %463 = vrot.lane.b32.xlu0 %v454, 2
    %v464 = vpop.permute.xlu0 %463
    %v465 = vsel %vm99, %v462, %v464
    %v466 = vsel %vm99, %v464, %v462
    %467 = vrot.lane.b32.xlu0 %v453, 126
    %v468 = vpop.permute.xlu0 %467
    %469 = vrot.lane.b32.xlu0 %v454, 126
    %v470 = vpop.permute.xlu0 %469
    %v471 = vsel %vm203, %v468, %v470
    %v472 = vsel %vm203, %v470, %v468
    %v473 = vsel %vm210, %v466, %v471
    %v474 = vsel %vm211, %v465, %v472
    %v475 = vmul.f32 %v458, %v473
    %v476 = vmul.f32 %v458, %v474
    %v477 = vadd.f32 %v459, %v475
    %v478 = vadd.f32 %v460, %v476
    %s479 = scalar_lea.vmem [#allocation2], 56
    %v480 = vld [vmem:[%s479] sm:$0xff]
    %s481 = scalar_lea.vmem [#allocation5], 56
    %v482 = vld [vmem:[%s481] sm:$0xff]
    %v483 = vmul.f32 %v480, %v477
    %v484 = vmul.f32 %v480, %v478
    %485 = vrot.lane.b32.xlu0 %v477, 1
    %v486 = vpop.permute.xlu0 %485
    %487 = vrot.lane.b32.xlu0 %v478, 1
    %v488 = vpop.permute.xlu0 %487
    %v489 = vsel %vm112, %v486, %v488
    %v490 = vsel %vm112, %v488, %v486
    %491 = vrot.lane.b32.xlu0 %v477, 127
    %v492 = vpop.permute.xlu0 %491
    %493 = vrot.lane.b32.xlu0 %v478, 127
    %v494 = vpop.permute.xlu0 %493
    %v495 = vsel %vm234, %v492, %v494
    %v496 = vsel %vm234, %v494, %v492
    %v497 = vsel %vm241, %v490, %v495
    %v498 = vsel %vm242, %v489, %v496
    %v499 = vmul.f32 %v482, %v497
    %v500 = vmul.f32 %v482, %v498
    %v501 = vadd.f32 %v483, %v499
    %v502 = vadd.f32 %v484, %v500
    %v503 = vpack.c.bf16 %v501, %v501
    %v504 = vpack.c.bf16 %v502, %v502
    %s505 = scalar_lea.vmem [#allocation7], 128
    %v506 = vld [vmem:[%s505] sm:$0xff]
    %v507 = vld [vmem:[%s505 + $0x8] sm:$0xff]
    %v508 = vld [vmem:[%s505 + $0x10] sm:$0xff]
    %v509 = vld [vmem:[%s505 + $0x18] sm:$0xff]
    %v510 = vld [vmem:[%s505 + $0x20] sm:$0xff]
    %v511 = vld [vmem:[%s505 + $0x28] sm:$0xff]
    %v512 = vld [vmem:[%s505 + $0x30] sm:$0xff]
    %v513 = vld [vmem:[%s505 + $0x38] sm:$0xff]
    %v514 = vld [vmem:[%s505 + $0x40] sm:$0xff]
    %v515 = vld [vmem:[%s505 + $0x48] sm:$0xff]
    %v516 = vld [vmem:[%s505 + $0x50] sm:$0xff]
    %v517 = vld [vmem:[%s505 + $0x58] sm:$0xff]
    %v518 = vld [vmem:[%s505 + $0x60] sm:$0xff]
    %v519 = vld [vmem:[%s505 + $0x68] sm:$0xff]
    %v520 = vld [vmem:[%s505 + $0x70] sm:$0xff]
    %v521 = vld [vmem:[%s505 + $0x78] sm:$0xff]
    %v538 = vunpack.c.l.b16 %v506
    %v539 = vunpack.c.h.b16 %v506
    %v540 = vunpack.c.l.b16 %v507
    %v541 = vunpack.c.h.b16 %v507
    %v542 = vunpack.c.l.b16 %v508
    %v543 = vunpack.c.h.b16 %v508
    %v544 = vunpack.c.l.b16 %v509
    %v545 = vunpack.c.h.b16 %v509
    %v546 = vunpack.c.l.b16 %v510
    %v547 = vunpack.c.h.b16 %v510
    %v548 = vunpack.c.l.b16 %v511
    %v549 = vunpack.c.h.b16 %v511
    %v550 = vunpack.c.l.b16 %v512
    %v551 = vunpack.c.h.b16 %v512
    %v552 = vunpack.c.l.b16 %v513
    %v553 = vunpack.c.h.b16 %v513
    %v554 = vunpack.c.l.b16 %v514
    %v555 = vunpack.c.h.b16 %v514
    %v556 = vunpack.c.l.b16 %v515
    %v557 = vunpack.c.h.b16 %v515
    %v558 = vunpack.c.l.b16 %v516
    %v559 = vunpack.c.h.b16 %v516
    %v560 = vunpack.c.l.b16 %v517
    %v561 = vunpack.c.h.b16 %v517
    %v562 = vunpack.c.l.b16 %v518
    %v563 = vunpack.c.h.b16 %v518
    %v564 = vunpack.c.l.b16 %v519
    %v565 = vunpack.c.h.b16 %v519
    %v566 = vunpack.c.l.b16 %v520
    %v567 = vunpack.c.h.b16 %v520
    %v568 = vunpack.c.l.b16 %v521
    %v569 = vunpack.c.h.b16 %v521
    %v570 = vpack.c.b16 %v540, %v538
    %v571 = vpack.c.b16 %v541, %v539
    %v572 = vpack.c.b16 %v544, %v542
    %v573 = vpack.c.b16 %v545, %v543
    %v574 = vpack.c.b16 %v548, %v546
    %v575 = vpack.c.b16 %v549, %v547
    %v576 = vpack.c.b16 %v552, %v550
    %v577 = vpack.c.b16 %v553, %v551
    %v578 = vpack.c.b16 %v556, %v554
    %v579 = vpack.c.b16 %v557, %v555
    %v580 = vpack.c.b16 %v560, %v558
    %v581 = vpack.c.b16 %v561, %v559
    %v582 = vpack.c.b16 %v564, %v562
    %v583 = vpack.c.b16 %v565, %v563
    %v584 = vpack.c.b16 %v568, %v566
    %v585 = vpack.c.b16 %v569, %v567
    %602 = vmatpush.bf16.msra.mxu0 %v584
    %603 = vmatpush.bf16.msra.mxu0 %v582
    %604 = vmatpush.bf16.msra.mxu0 %v580
    %605 = vmatpush.bf16.msra.mxu0 %v578
    %606 = vmatpush.bf16.msra.mxu0 %v576
    %607 = vmatpush.bf16.msra.mxu0 %v574
    %608 = vmatpush.bf16.msra.mxu0 %v572
    %609 = vmatpush.bf16.msra.mxu0 %v570
    %610 = vmatmul.bf16.gmra.mxu0 %v504
    %v611 = vpop.f32.mrf.mxu0
    %v612 = vadd.f32 0.0, %v611
    %v613 = vpop.f32.mrf.mxu0
    %614 = vdwg.mxu0
    %615 = vmatpush.bf16.msra.mxu0 %v585
    %616 = vmatpush.bf16.msra.mxu0 %v583
    %617 = vmatpush.bf16.msra.mxu0 %v581
    %618 = vmatpush.bf16.msra.mxu0 %v579
    %619 = vmatpush.bf16.msra.mxu0 %v577
    %620 = vmatpush.bf16.msra.mxu0 %v575
    %621 = vmatpush.bf16.msra.mxu0 %v573
    %622 = vmatpush.bf16.msra.mxu0 %v571
    %623 = vmatmul.bf16.gmra.mxu0 %v504
    %v624 = vpop.f32.mrf.mxu0
    %v625 = vadd.f32 0.0, %v624
    %v626 = vpop.f32.mrf.mxu0
    %627 = vdwg.mxu0
    %v628 = vmul.f32 %v123, %v625
    %v629 = vmul.f32 %v124, %v612
    %630 = vmatpush.bf16.msra.mxu0 %v584
    %631 = vmatpush.bf16.msra.mxu0 %v582
    %632 = vmatpush.bf16.msra.mxu0 %v580
    %633 = vmatpush.bf16.msra.mxu0 %v578
    %634 = vmatpush.bf16.msra.mxu0 %v576
    %635 = vmatpush.bf16.msra.mxu0 %v574
    %636 = vmatpush.bf16.msra.mxu0 %v572
    %637 = vmatpush.bf16.msra.mxu0 %v570
    %638 = vmatmul.bf16.gmra.mxu0 %v503
    %v639 = vpop.f32.mrf.mxu0
    %v640 = vadd.f32 %v628, %v639
    %v641 = vpop.f32.mrf.mxu0
    %642 = vdwg.mxu0
    %643 = vmatpush.bf16.msra.mxu0 %v585
    %644 = vmatpush.bf16.msra.mxu0 %v583
    %645 = vmatpush.bf16.msra.mxu0 %v581
    %646 = vmatpush.bf16.msra.mxu0 %v579
    %647 = vmatpush.bf16.msra.mxu0 %v577
    %648 = vmatpush.bf16.msra.mxu0 %v575
    %649 = vmatpush.bf16.msra.mxu0 %v573
    %650 = vmatpush.bf16.msra.mxu0 %v571
    %651 = vmatmul.bf16.gmra.mxu0 %v503
    %v652 = vpop.f32.mrf.mxu0
    %v653 = vadd.f32 %v629, %v652
    %v654 = vpop.f32.mrf.mxu0
    %655 = vdwg.mxu0
    %656 = vst [vmem:[#allocation8] sm:$0xff] %v640
    %657 = vst [vmem:[#allocation8 + $0x8] sm:$0xff] %v653
    // Predicated region
    $region26: #{tpu_custom_call.1} parent=1 // pred_check
      _
    $region27: #{tpu_custom_call.1} parent=1 // pred_check_branch
      %659 = sbr.rel (0) target = $region29
    $region28: #{tpu_custom_call.1} parent=1 // pred_region
      %661 = vsyncadd [#allocation4], 0
      %s663 = sshll.u32 [#allocation8], 4
      %s664 = int_to_ptr.vmem [resolvable:$true] %s663
      %s665 = sshll.u32 %s3, 4
      %s666 = int_to_ptr.hbm [resolvable:$true] %s665
      %668 = dma.vmem_to_hbm [thread:$0]  %s664, 256, %s666, [#allocation4]
    $region29: #{tpu_custom_call.1} parent=1 // pred_fallthru
      _
    // Predicated region
    $region30: #{tpu_custom_call.1} parent=1 // pred_check
      _
    $region31: #{tpu_custom_call.1} parent=1 // pred_check_branch
      %670 = sbr.rel (0) target = $region33
    $region32: #{tpu_custom_call.1} parent=1 // pred_region
      %672 = dma.done [#allocation4], 256
    $region33: #{tpu_custom_call.1} parent=1 // pred_fallthru
      _
    %673 = vsyncpa [#allocation3], 1
    %674 = vsyncpa [#allocation6], 1
    %675 = vsyncpa [#allocation4], 1

</llo_original>
